<compile_context>
chip_gen: v6e
topology: v6e:2x2x1
jax: 0.10.0
libtpu: 0.0.40
codegen_flags: <defaults>
</compile_context>

<pallas_src>
import jax
import jax.numpy as jnp
from jax.experimental import pallas as pl
from jax.experimental.pallas import tpu as pltpu

IN_DIM, H1, H2, OUT_DIM = 300, 256, 128, 32
LEAKY_SLOPE = 0.01  # nn.LeakyReLU default negative_slope


def _leaky_relu(v):
    return jnp.where(v > 0, v, LEAKY_SLOPE * v)


def encoder_kernel(x_ref, w1_ref, b1_ref, w2_ref, b2_ref, w3_ref, b3_ref, o_ref):
    # Cast x to the compute dtype in-kernel (keeps HBM read at the original width).
    x = x_ref[...].astype(w1_ref.dtype)
    h1 = _leaky_relu(
        jnp.dot(x, w1_ref[...], preferred_element_type=jnp.float32) + b1_ref[...]
    )
    h2 = _leaky_relu(
        jnp.dot(h1.astype(w2_ref.dtype), w2_ref[...],
                preferred_element_type=jnp.float32) + b2_ref[...]
    )
    h3 = _leaky_relu(
        jnp.dot(h2.astype(w3_ref.dtype), w3_ref[...],
                preferred_element_type=jnp.float32) + b3_ref[...]
    )
    o_ref[...] = h3.astype(o_ref.dtype)


def encoder_forward(x, params, *, batch_tile=None, compute_dtype=jnp.float32):
    """x: (B, 300). params: dict of w1,b1,w2,b2,w3,b3; weights stored (in, out).

    compute_dtype=jnp.bfloat16 enables the bf16 MXU path (v6e/v7x); accumulation,
    bias add and LeakyReLU stay in f32. Default f32 matches PyTorch numerics.
    """
    B = x.shape[0]
    assert x.shape[1] == IN_DIM

    # Throughput-oriented tile: as many rows as possible up to 512 (multiple of 8).
    if batch_tile is None:
        batch_tile = min(512, max(8, ((B + 7) // 8) * 8))
    assert batch_tile % 8 == 0

    n_tiles = pl.cdiv(B, batch_tile)
    B_pad = n_tiles * batch_tile
    # Pad the batch only when needed (static Python branch -> no-op otherwise).
    x_in = jnp.pad(x, ((0, B_pad - B), (0, 0))) if B_pad != B else x

    w1 = params["w1"].astype(compute_dtype)
    b1 = params["b1"].reshape(1, H1).astype(jnp.float32)
    w2 = params["w2"].astype(compute_dtype)
    b2 = params["b2"].reshape(1, H2).astype(jnp.float32)
    w3 = params["w3"].astype(compute_dtype)
    b3 = params["b3"].reshape(1, OUT_DIM).astype(jnp.float32)

    def resident(shape):
        # Constant index_map -> same block every step; Pallas keeps it VMEM-resident.
        return pl.BlockSpec(shape, lambda i: (0,) * len(shape))

    w_itemsize = jnp.dtype(compute_dtype).itemsize
    flops = 2 * B_pad * (IN_DIM * H1 + H1 * H2 + H2 * OUT_DIM)
    bytes_accessed = int(
        B_pad * IN_DIM * x_in.dtype.itemsize                      # x
        + B_pad * OUT_DIM * 4                                     # output (f32)
        + (IN_DIM * H1 + H1 * H2 + H2 * OUT_DIM) * w_itemsize     # weights
        + (H1 + H2 + OUT_DIM) * 4                                 # biases (f32)
    )

    out = pl.pallas_call(
        encoder_kernel,
        out_shape=jax.ShapeDtypeStruct((B_pad, OUT_DIM), jnp.float32),
        grid_spec=pltpu.PrefetchScalarGridSpec(
            num_scalar_prefetch=0,
            grid=(n_tiles,),
            in_specs=[
                pl.BlockSpec((batch_tile, IN_DIM), lambda i: (i, 0)),  # x tile
                resident((IN_DIM, H1)),    # w1
                resident((1, H1)),         # b1
                resident((H1, H2)),        # w2
                resident((1, H2)),         # b2
                resident((H2, OUT_DIM)),   # w3
                resident((1, OUT_DIM)),    # b3
            ],
            out_specs=pl.BlockSpec((batch_tile, OUT_DIM), lambda i: (i, 0)),
        ),
        compiler_params=pltpu.CompilerParams(
            dimension_semantics=("parallel",),
        ),
        cost_estimate=pl.CostEstimate(
            flops=flops, transcendentals=0, bytes_accessed=bytes_accessed
        ),
    )(x_in, w1, b1, w2, b2, w3, b3)

    return out[:B] if B_pad != B else out


def init_params(key):
    """Deterministic init mimicking nn.Linear (uniform +-1/sqrt(fan_in)).
    Weights stored (in, out), i.e. already transposed vs PyTorch's (out, in)."""
    ks = jax.random.split(key, 6)

    def lin(kw, kb, fan_in, fan_out):
        bound = 1.0 / jnp.sqrt(fan_in)
        w = jax.random.uniform(kw, (fan_in, fan_out), jnp.float32, -bound, bound)
        b = jax.random.uniform(kb, (1, fan_out), jnp.float32, -bound, bound)
        return w, b

    w1, b1 = lin(ks[0], ks[1], IN_DIM, H1)
    w2, b2 = lin(ks[2], ks[3], H1, H2)
    w3, b3 = lin(ks[4], ks[5], H2, OUT_DIM)
    return {"w1": w1, "b1": b1, "w2": w2, "b2": b2, "w3": w3, "b3": b3}


def encoder_ref(x, p):
    h = _leaky_relu(x @ p["w1"] + p["b1"])
    h = _leaky_relu(h @ p["w2"] + p["b2"])
    h = _leaky_relu(h @ p["w3"] + p["b3"])
    return h


if __name__ == "__main__":
    key = jax.random.PRNGKey(0)
    kx, kx2, kp = jax.random.split(key, 3)
    params = init_params(kp)

    # --- small f32 check (bit-level tolerance) -------------------------------
    B = 8
    x = jax.random.normal(kx, (B, IN_DIM), dtype=jnp.float32)
    out = jax.block_until_ready(encoder_forward(x, params))
    ref = encoder_ref(x, params)
    assert out.shape == (B, OUT_DIM)
    assert jnp.allclose(out, ref, atol=1e-5, rtol=1e-5), "f32 mismatch vs reference"

    # --- larger, non-divisible batch on the bf16 fast path (v6e/v7x lever) ---
    B2 = 600  # not a multiple of the tile: exercises wrapper row-padding + multi-step grid
    x2 = jax.random.normal(kx2, (B2, IN_DIM), dtype=jnp.float32)
    out2 = jax.block_until_ready(
        encoder_forward(x2, params, batch_tile=256, compute_dtype=jnp.bfloat16)
    )
    ref2 = encoder_ref(x2, params)
    assert out2.shape == (B2, OUT_DIM)
    assert jnp.allclose(out2, ref2, atol=5e-2, rtol=5e-2), "bf16 mismatch vs reference"

    print("KERNEL_OK")
</pallas_src>

<mosaic_0001>
module attributes {stable_mosaic.version = 11 : i64} {
  func.func @encoder_kernel(%arg0: i32, %arg1: memref<8x300xf32, #tpu.memory_space<vmem>>, %arg2: memref<300x256xf32, #tpu.memory_space<vmem>>, %arg3: memref<1x256xf32, #tpu.memory_space<vmem>>, %arg4: memref<256x128xf32, #tpu.memory_space<vmem>>, %arg5: memref<1x128xf32, #tpu.memory_space<vmem>>, %arg6: memref<128x32xf32, #tpu.memory_space<vmem>>, %arg7: memref<1x32xf32, #tpu.memory_space<vmem>>, %arg8: memref<8x32xf32, #tpu.memory_space<vmem>>) attributes {dimension_semantics = [#tpu.dimension_semantics<parallel>], iteration_bounds = array<i64: 1>, scalar_prefetch = 0 : i64, scratch_operands = 0 : i64, tpu.core_type = #tpu.core_type<tc>, window_params = [{transform_indices = @transform_0, window_bounds = array<i64: 8, 300>}, {pipeline_mode = #tpu.pipeline_mode<synchronous>, transform_indices = @transform_1, window_bounds = array<i64: 300, 256>}, {pipeline_mode = #tpu.pipeline_mode<synchronous>, transform_indices = @transform_2, window_bounds = array<i64: 1, 256>}, {pipeline_mode = #tpu.pipeline_mode<synchronous>, transform_indices = @transform_3, window_bounds = array<i64: 256, 128>}, {pipeline_mode = #tpu.pipeline_mode<synchronous>, transform_indices = @transform_4, window_bounds = array<i64: 1, 128>}, {pipeline_mode = #tpu.pipeline_mode<synchronous>, transform_indices = @transform_5, window_bounds = array<i64: 128, 32>}, {pipeline_mode = #tpu.pipeline_mode<synchronous>, transform_indices = @transform_6, window_bounds = array<i64: 1, 32>}, {transform_indices = @transform_7, window_bounds = array<i64: 8, 32>}]} {
    %c0 = arith.constant 0 : index
    %c0_0 = arith.constant 0 : index
    %0 = vector.load %arg1[%c0, %c0_0] : memref<8x300xf32, #tpu.memory_space<vmem>>, vector<8x300xf32>
    %c0_1 = arith.constant 0 : index
    %c0_2 = arith.constant 0 : index
    %1 = vector.load %arg2[%c0_1, %c0_2] : memref<300x256xf32, #tpu.memory_space<vmem>>, vector<300x256xf32>
    %cst = arith.constant dense<0.000000e+00> : vector<8x256xf32>
    %2 = tpu.matmul %0, %1, %cst {dimension_numbers = #tpu.dot_dimension_numbers<[1], [0], [0], [1], [0, 0, 1, 1], [], []>} : vector<8x300xf32>, vector<300x256xf32>, vector<8x256xf32> -> vector<8x256xf32>
    %c0_3 = arith.constant 0 : index
    %c0_4 = arith.constant 0 : index
    %3 = vector.load %arg3[%c0_3, %c0_4] : memref<1x256xf32, #tpu.memory_space<vmem>>, vector<1x256xf32>
    %4 = vector.broadcast %3 : vector<1x256xf32> to vector<8x256xf32>
    %5 = arith.addf %2, %4 : vector<8x256xf32>
    %cst_5 = arith.constant 0.000000e+00 : f32
    %6 = vector.broadcast %cst_5 : f32 to vector<8x256xf32>
    %7 = arith.cmpf ogt, %5, %6 : vector<8x256xf32>
    %cst_6 = arith.constant 0.00999999977 : f32
    %8 = vector.broadcast %cst_6 : f32 to vector<8x256xf32>
    %9 = arith.mulf %8, %5 : vector<8x256xf32>
    %10 = arith.select %7, %5, %9 : vector<8x256xi1>, vector<8x256xf32>
    %c0_7 = arith.constant 0 : index
    %c0_8 = arith.constant 0 : index
    %11 = vector.load %arg4[%c0_7, %c0_8] : memref<256x128xf32, #tpu.memory_space<vmem>>, vector<256x128xf32>
    %cst_9 = arith.constant dense<0.000000e+00> : vector<8x128xf32>
    %12 = tpu.matmul %10, %11, %cst_9 {dimension_numbers = #tpu.dot_dimension_numbers<[1], [0], [0], [1], [0, 0, 1, 1], [], []>} : vector<8x256xf32>, vector<256x128xf32>, vector<8x128xf32> -> vector<8x128xf32>
    %c0_10 = arith.constant 0 : index
    %c0_11 = arith.constant 0 : index
    %13 = vector.load %arg5[%c0_10, %c0_11] : memref<1x128xf32, #tpu.memory_space<vmem>>, vector<1x128xf32>
    %14 = vector.broadcast %13 : vector<1x128xf32> to vector<8x128xf32>
    %15 = arith.addf %12, %14 : vector<8x128xf32>
    %cst_12 = arith.constant 0.000000e+00 : f32
    %16 = vector.broadcast %cst_12 : f32 to vector<8x128xf32>
    %17 = arith.cmpf ogt, %15, %16 : vector<8x128xf32>
    %cst_13 = arith.constant 0.00999999977 : f32
    %18 = vector.broadcast %cst_13 : f32 to vector<8x128xf32>
    %19 = arith.mulf %18, %15 : vector<8x128xf32>
    %20 = arith.select %17, %15, %19 : vector<8x128xi1>, vector<8x128xf32>
    %c0_14 = arith.constant 0 : index
    %c0_15 = arith.constant 0 : index
    %21 = vector.load %arg6[%c0_14, %c0_15] : memref<128x32xf32, #tpu.memory_space<vmem>>, vector<128x32xf32>
    %cst_16 = arith.constant dense<0.000000e+00> : vector<8x32xf32>
    %22 = tpu.matmul %20, %21, %cst_16 {dimension_numbers = #tpu.dot_dimension_numbers<[1], [0], [0], [1], [0, 0, 1, 1], [], []>} : vector<8x128xf32>, vector<128x32xf32>, vector<8x32xf32> -> vector<8x32xf32>
    %c0_17 = arith.constant 0 : index
    %c0_18 = arith.constant 0 : index
    %23 = vector.load %arg7[%c0_17, %c0_18] : memref<1x32xf32, #tpu.memory_space<vmem>>, vector<1x32xf32>
    %24 = vector.broadcast %23 : vector<1x32xf32> to vector<8x32xf32>
    %25 = arith.addf %22, %24 : vector<8x32xf32>
    %cst_19 = arith.constant 0.000000e+00 : f32
    %26 = vector.broadcast %cst_19 : f32 to vector<8x32xf32>
    %27 = arith.cmpf ogt, %25, %26 : vector<8x32xf32>
    %cst_20 = arith.constant 0.00999999977 : f32
    %28 = vector.broadcast %cst_20 : f32 to vector<8x32xf32>
    %29 = arith.mulf %28, %25 : vector<8x32xf32>
    %30 = arith.select %27, %25, %29 : vector<8x32xi1>, vector<8x32xf32>
    %c0_21 = arith.constant 0 : index
    %c0_22 = arith.constant 0 : index
    %31 = vector.load %arg8[%c0_21, %c0_22] : memref<8x32xf32, #tpu.memory_space<vmem>>, vector<8x32xf32>
    tpu.vector_store %arg8[%c0_21, %c0_22], %30 {strides = array<i32>} : memref<8x32xf32, #tpu.memory_space<vmem>>, vector<8x32xf32>,
    return
  }
  func.func @transform_0(%arg0: i32) -> (i32, i32) {
    %c0_i32 = arith.constant 0 : i32
    %c0_i32_0 = arith.constant 0 : i32
    return %arg0, %c0_i32 : i32, i32
  }
  func.func @transform_1(%arg0: i32) -> (i32, i32) {
    %c0_i32 = arith.constant 0 : i32
    %c0_i32_0 = arith.constant 0 : i32
    %c0_i32_1 = arith.constant 0 : i32
    return %c0_i32, %c0_i32_0 : i32, i32
  }
  func.func @transform_2(%arg0: i32) -> (i32, i32) {
    %c0_i32 = arith.constant 0 : i32
    %c0_i32_0 = arith.constant 0 : i32
    %c0_i32_1 = arith.constant 0 : i32
    return %c0_i32, %c0_i32_0 : i32, i32
  }
  func.func @transform_3(%arg0: i32) -> (i32, i32) {
    %c0_i32 = arith.constant 0 : i32
    %c0_i32_0 = arith.constant 0 : i32
    %c0_i32_1 = arith.constant 0 : i32
    return %c0_i32, %c0_i32_0 : i32, i32
  }
  func.func @transform_4(%arg0: i32) -> (i32, i32) {
    %c0_i32 = arith.constant 0 : i32
    %c0_i32_0 = arith.constant 0 : i32
    %c0_i32_1 = arith.constant 0 : i32
    return %c0_i32, %c0_i32_0 : i32, i32
  }
  func.func @transform_5(%arg0: i32) -> (i32, i32) {
    %c0_i32 = arith.constant 0 : i32
    %c0_i32_0 = arith.constant 0 : i32
    %c0_i32_1 = arith.constant 0 : i32
    return %c0_i32, %c0_i32_0 : i32, i32
  }
  func.func @transform_6(%arg0: i32) -> (i32, i32) {
    %c0_i32 = arith.constant 0 : i32
    %c0_i32_0 = arith.constant 0 : i32
    %c0_i32_1 = arith.constant 0 : i32
    return %c0_i32, %c0_i32_0 : i32, i32
  }
  func.func @transform_7(%arg0: i32) -> (i32, i32) {
    %c0_i32 = arith.constant 0 : i32
    %c0_i32_0 = arith.constant 0 : i32
    return %arg0, %c0_i32 : i32, i32
  }
}

</mosaic_0001>

<llo_original>
// kernel: tpu_custom_call.1
$region0: #{tpu_custom_call.1}
  #allocation0 [shape = 'u32[]', space=smem, size = 0x4, offset = 0x4, fixed_abs, tag = 'smem constant byte address 0x4 - core index']
  #allocation1 [shape = 'u32[144,128]{1,0:T(1,128)}', space=vmem, size = 0x12000, scoped, tag = 'internal scratch']
  %s0 = inlined_call_operand.vmem [shape: f32[8,300], index: 0, kind: input, shape index: {}]
  %s1 = inlined_call_operand.hbm [shape: f32[300,256], index: 1, kind: input, shape index: {}]
  %s2 = inlined_call_operand.vmem [shape: f32[1,256], index: 2, kind: input, shape index: {}]
  %s3 = inlined_call_operand.hbm [shape: f32[256,128], index: 3, kind: input, shape index: {}]
  %s4 = inlined_call_operand.vmem [shape: f32[1,128], index: 4, kind: input, shape index: {}]
  %s5 = inlined_call_operand.vmem [shape: f32[128,32], index: 5, kind: input, shape index: {}]
  %s6 = inlined_call_operand.vmem [shape: f32[1,32], index: 6, kind: input, shape index: {}]
  %s7 = inlined_call_operand.hbm [shape: f32[8,32], index: 7, kind: output, shape index: {}]
  %s8 = sld [smem:[#allocation0]]
  $region46: #{tpu_custom_call.1} parent=0
    _
  %s10 = ssub.s32 1, %s8
  %s11 = scalar_select 0, %s10, %s8
  $region1: #{tpu_custom_call.1} parent=0
    #allocation2 [shape = 'u8[311296]{0}', space=vmem, size = 0x4c000, scoped, tag = 'input window, operand 1, single buffered']
    #allocation3 [shape = 's32[1]{0}', space=sflag, size = 0x4, scoped, tag = 'scoped memory for tpu_custom_call.1']
    #allocation4 [shape = 's32[1]{0}', space=sflag, size = 0x4, scoped, tag = 'scoped memory for tpu_custom_call.1']
    #allocation5 [shape = 'u8[131072]{0}', space=vmem, size = 0x20000, scoped, tag = 'input window, operand 3, single buffered']
    #allocation6 [shape = 's32[1]{0}', space=sflag, size = 0x4, scoped, tag = 'scoped memory for tpu_custom_call.1']
    #allocation7 [shape = 'u8[4096]{0}', space=vmem, size = 0x1000, scoped, tag = 'output window, operand 0, single buffered']
    %12 = vsyncpa [#allocation3], 0
    %13 = vsyncpa [#allocation6], 0
    %14 = vsyncpa [#allocation4], 0
    // Predicated region
    $region2: #{tpu_custom_call.1} parent=1 // pred_check
      _
    $region3: #{tpu_custom_call.1} parent=1 // pred_check_branch
      %16 = sbr.rel (0) target = $region5
    $region4: #{tpu_custom_call.1} parent=1 // pred_region
      _
    $region5: #{tpu_custom_call.1} parent=1 // pred_fallthru
      _
    // Predicated region
    $region6: #{tpu_custom_call.1} parent=1 // pred_check
      _
    $region7: #{tpu_custom_call.1} parent=1 // pred_check_branch
      %18 = sbr.rel (0) target = $region9
    $region8: #{tpu_custom_call.1} parent=1 // pred_region
      %s20 = ssub.s32 9728, 9728
      %21 = vsyncadd [#allocation3], %s20
      %s22 = sshll.u32 [#allocation2], 4
      %s23 = int_to_ptr.vmem [resolvable:$true] %s22
      %28 = dma.hbm_to_vmem [thread:$0]  %s1, 9728, %s23, [#allocation3], 256, 256, 16
    $region9: #{tpu_custom_call.1} parent=1 // pred_fallthru
      _
    // Predicated region
    $region10: #{tpu_custom_call.1} parent=1 // pred_check
      _
    $region11: #{tpu_custom_call.1} parent=1 // pred_check_branch
      %30 = sbr.rel (0) target = $region13
    $region12: #{tpu_custom_call.1} parent=1 // pred_region
      _
    $region13: #{tpu_custom_call.1} parent=1 // pred_fallthru
      _
    // Predicated region
    $region14: #{tpu_custom_call.1} parent=1 // pred_check
      _
    $region15: #{tpu_custom_call.1} parent=1 // pred_check_branch
      %32 = sbr.rel (0) target = $region17
    $region16: #{tpu_custom_call.1} parent=1 // pred_region
      %s34 = ssub.s32 4096, 4096
      %35 = vsyncadd [#allocation6], %s34
      %s36 = sshll.u32 [#allocation5], 4
      %s37 = int_to_ptr.vmem [resolvable:$true] %s36
      %42 = dma.hbm_to_vmem [thread:$0]  %s3, 4096, %s37, [#allocation6], 128, 128, 8
    $region17: #{tpu_custom_call.1} parent=1 // pred_fallthru
      _
    // Predicated region
    $region18: #{tpu_custom_call.1} parent=1 // pred_check
      _
    $region19: #{tpu_custom_call.1} parent=1 // pred_check_branch
      %44 = sbr.rel (0) target = $region21
    $region20: #{tpu_custom_call.1} parent=1 // pred_region
      _
    $region21: #{tpu_custom_call.1} parent=1 // pred_fallthru
      _
    // Predicated region
    $region22: #{tpu_custom_call.1} parent=1 // pred_check
      _
    $region23: #{tpu_custom_call.1} parent=1 // pred_check_branch
      %46 = sbr.rel (0) target = $region25
    $region24: #{tpu_custom_call.1} parent=1 // pred_region
      _
    $region25: #{tpu_custom_call.1} parent=1 // pred_fallthru
      _
    // Predicated region
    $region26: #{tpu_custom_call.1} parent=1 // pred_check
      _
    $region27: #{tpu_custom_call.1} parent=1 // pred_check_branch
      %48 = sbr.rel (0) target = $region29
    $region28: #{tpu_custom_call.1} parent=1 // pred_region
      _
    $region29: #{tpu_custom_call.1} parent=1 // pred_fallthru
      _
    // Predicated region
    $region30: #{tpu_custom_call.1} parent=1 // pred_check
      _
    $region31: #{tpu_custom_call.1} parent=1 // pred_check_branch
      %50 = sbr.rel (0) target = $region33
    $region32: #{tpu_custom_call.1} parent=1 // pred_region
      %51 = dma.done [#allocation3], 9728
    $region33: #{tpu_custom_call.1} parent=1 // pred_fallthru
      _
    // Predicated region
    $region34: #{tpu_custom_call.1} parent=1 // pred_check
      _
    $region35: #{tpu_custom_call.1} parent=1 // pred_check_branch
      %53 = sbr.rel (0) target = $region37
    $region36: #{tpu_custom_call.1} parent=1 // pred_region
      %54 = dma.done [#allocation6], 4096
    $region37: #{tpu_custom_call.1} parent=1 // pred_fallthru
      _
    %v55 = vld [vmem:[%s0] sm:$0xff]
    %v56 = vld [vmem:[%s0 + $0x8] sm:$0xff]
    %v57 = vld [vmem:[%s0 + $0x10] sm:$0xff]
    %v58 = vld [vmem:[#allocation2] sm:$0xff]
    %v59 = vld [vmem:[#allocation2 + $0x8] sm:$0xff]
    %v60 = vld [vmem:[#allocation2 + $0x10] sm:$0xff]
    %v61 = vld [vmem:[#allocation2 + $0x18] sm:$0xff]
    %v62 = vld [vmem:[#allocation2 + $0x20] sm:$0xff]
    %v63 = vld [vmem:[#allocation2 + $0x28] sm:$0xff]
    %v64 = vld [vmem:[#allocation2 + $0x30] sm:$0xff]
    %v65 = vld [vmem:[#allocation2 + $0x38] sm:$0xff]
    %v66 = vld [vmem:[#allocation2 + $0x40] sm:$0xff]
    %v67 = vld [vmem:[#allocation2 + $0x48] sm:$0xff]
    %v68 = vld [vmem:[#allocation2 + $0x50] sm:$0xff]
    %v69 = vld [vmem:[#allocation2 + $0x58] sm:$0xff]
    %v70 = vld [vmem:[#allocation2 + $0x60] sm:$0xff]
    %v71 = vld [vmem:[#allocation2 + $0x68] sm:$0xff]
    %v72 = vld [vmem:[#allocation2 + $0x70] sm:$0xff]
    %v73 = vld [vmem:[#allocation2 + $0x78] sm:$0xff]
    %v74 = vld [vmem:[#allocation2 + $0x80] sm:$0xff]
    %v75 = vld [vmem:[#allocation2 + $0x88] sm:$0xff]
    %v76 = vld [vmem:[#allocation2 + $0x90] sm:$0xff]
    %v77 = vld [vmem:[#allocation2 + $0x98] sm:$0xff]
    %v78 = vld [vmem:[#allocation2 + $0xa0] sm:$0xff]
    %v79 = vld [vmem:[#allocation2 + $0xa8] sm:$0xff]
    %v80 = vld [vmem:[#allocation2 + $0xb0] sm:$0xff]
    %v81 = vld [vmem:[#allocation2 + $0xb8] sm:$0xff]
    %v82 = vld [vmem:[#allocation2 + $0xc0] sm:$0xff]
    %v83 = vld [vmem:[#allocation2 + $0xc8] sm:$0xff]
    %v84 = vld [vmem:[#allocation2 + $0xd0] sm:$0xff]
    %v85 = vld [vmem:[#allocation2 + $0xd8] sm:$0xff]
    %v86 = vld [vmem:[#allocation2 + $0xe0] sm:$0xff]
    %v87 = vld [vmem:[#allocation2 + $0xe8] sm:$0xff]
    %v88 = vld [vmem:[#allocation2 + $0xf0] sm:$0xff]
    %v89 = vld [vmem:[#allocation2 + $0xf8] sm:$0xff]
    %v90 = vld [vmem:[#allocation2 + $0x100] sm:$0xff]
    %v91 = vld [vmem:[#allocation2 + $0x108] sm:$0xff]
    %v92 = vld [vmem:[#allocation2 + $0x110] sm:$0xff]
    %v93 = vld [vmem:[#allocation2 + $0x118] sm:$0xff]
    %v94 = vld [vmem:[#allocation2 + $0x120] sm:$0xff]
    %v95 = vld [vmem:[#allocation2 + $0x128] sm:$0xff]
    %v96 = vld [vmem:[#allocation2 + $0x130] sm:$0xff]
    %v97 = vld [vmem:[#allocation2 + $0x138] sm:$0xff]
    %v98 = vld [vmem:[#allocation2 + $0x140] sm:$0xff]
    %v99 = vld [vmem:[#allocation2 + $0x148] sm:$0xff]
    %v100 = vld [vmem:[#allocation2 + $0x150] sm:$0xff]
    %v101 = vld [vmem:[#allocation2 + $0x158] sm:$0xff]
    %v102 = vld [vmem:[#allocation2 + $0x160] sm:$0xff]
    %v103 = vld [vmem:[#allocation2 + $0x168] sm:$0xff]
    %v104 = vld [vmem:[#allocation2 + $0x170] sm:$0xff]
    %v105 = vld [vmem:[#allocation2 + $0x178] sm:$0xff]
    %v106 = vld [vmem:[#allocation2 + $0x180] sm:$0xff]
    %v107 = vld [vmem:[#allocation2 + $0x188] sm:$0xff]
    %v108 = vld [vmem:[#allocation2 + $0x190] sm:$0xff]
    %v109 = vld [vmem:[#allocation2 + $0x198] sm:$0xff]
    %v110 = vld [vmem:[#allocation2 + $0x1a0] sm:$0xff]
    %v111 = vld [vmem:[#allocation2 + $0x1a8] sm:$0xff]
    %v112 = vld [vmem:[#allocation2 + $0x1b0] sm:$0xff]
    %v113 = vld [vmem:[#allocation2 + $0x1b8] sm:$0xff]
    %v114 = vld [vmem:[#allocation2 + $0x1c0] sm:$0xff]
    %v115 = vld [vmem:[#allocation2 + $0x1c8] sm:$0xff]
    %v116 = vld [vmem:[#allocation2 + $0x1d0] sm:$0xff]
    %v117 = vld [vmem:[#allocation2 + $0x1d8] sm:$0xff]
    %v118 = vld [vmem:[#allocation2 + $0x1e0] sm:$0xff]
    %v119 = vld [vmem:[#allocation2 + $0x1e8] sm:$0xff]
    %v120 = vld [vmem:[#allocation2 + $0x1f0] sm:$0xff]
    %v121 = vld [vmem:[#allocation2 + $0x1f8] sm:$0xff]
    %v122 = vld [vmem:[#allocation2 + $0x200] sm:$0xff]
    %v123 = vld [vmem:[#allocation2 + $0x208] sm:$0xff]
    %v124 = vld [vmem:[#allocation2 + $0x210] sm:$0xff]
    %v125 = vld [vmem:[#allocation2 + $0x218] sm:$0xff]
    %v126 = vld [vmem:[#allocation2 + $0x220] sm:$0xff]
    %v127 = vld [vmem:[#allocation2 + $0x228] sm:$0xff]
    %v128 = vld [vmem:[#allocation2 + $0x230] sm:$0xff]
    %v129 = vld [vmem:[#allocation2 + $0x238] sm:$0xff]
    %v130 = vld [vmem:[#allocation2 + $0x240] sm:$0xff]
    %v131 = vld [vmem:[#allocation2 + $0x248] sm:$0xff]
    %v132 = vld [vmem:[#allocation2 + $0x250] sm:$0xf]
    %v133 = vld [vmem:[#allocation2 + $0x258] sm:$0xf]
    %v134 = vld [vmem:[%s2] sm:$0x3]
    %v136 = vlaneseq
    %v137 = vshrl.u32 %v136, 7
    %v138 = vsub.s32 0, %v137
    %v139 = vrot.slane %v134, %v138
    %v140 = vlaneseq
    %v141 = vshrl.u32 %v140, 7
    %v142 = vsub.s32 1, %v141
    %v143 = vrot.slane %v134, %v142
    %vm146 = vcmask 359424
    %v148 = vsel %vm146, %v57, 0
    %vm150 = vcmask 1043456
    %v152 = vsel %vm150, %v132, 0
    %v155 = vsel %vm150, %v133, 0
    %157 = vmatprep.subr.mxu0 %v89
    %158 = vmatpush1.msra.mxu0 %v88
    %159 = vmatprep.subr.mxu0 %v87
    %160 = vmatpush1.msra.mxu0 %v86
    %161 = vmatprep.subr.mxu0 %v85
    %162 = vmatpush1.msra.mxu0 %v84
    %163 = vmatprep.subr.mxu0 %v83
    %164 = vmatpush1.msra.mxu0 %v82
    %165 = vmatprep.subr.mxu0 %v81
    %166 = vmatpush1.msra.mxu0 %v80
    %167 = vmatprep.subr.mxu0 %v79
    %168 = vmatpush1.msra.mxu0 %v78
    %169 = vmatprep.subr.mxu0 %v77
    %170 = vmatpush1.msra.mxu0 %v76
    %171 = vmatprep.subr.mxu0 %v75
    %172 = vmatpush1.msra.mxu0 %v74
    %173 = vmatprep.subr.mxu0 %v73
    %174 = vmatpush1.msra.mxu0 %v72
    %175 = vmatprep.subr.mxu0 %v71
    %176 = vmatpush1.msra.mxu0 %v70
    %177 = vmatprep.subr.mxu0 %v69
    %178 = vmatpush1.msra.mxu0 %v68
    %179 = vmatprep.subr.mxu0 %v67
    %180 = vmatpush1.msra.mxu0 %v66
    %181 = vmatprep.subr.mxu0 %v65
    %182 = vmatpush1.msra.mxu0 %v64
    %183 = vmatprep.subr.mxu0 %v63
    %184 = vmatpush1.msra.mxu0 %v62
    %185 = vmatprep.subr.mxu0 %v61
    %186 = vmatpush1.msra.mxu0 %v60
    %187 = vmatprep.subr.mxu0 %v59
    %188 = vmatpush1.msra.mxu0 %v58
    %189 = vmatprep.subr.mxu0 %v121
    %190 = vmatpush2.msra.mxu0 %v120
    %191 = vmatprep.subr.mxu0 %v119
    %192 = vmatpush2.msra.mxu0 %v118
    %193 = vmatprep.subr.mxu0 %v117
    %194 = vmatpush2.msra.mxu0 %v116
    %195 = vmatprep.subr.mxu0 %v115
    %196 = vmatpush2.msra.mxu0 %v114
    %197 = vmatprep.subr.mxu0 %v113
    %198 = vmatpush2.msra.mxu0 %v112
    %199 = vmatprep.subr.mxu0 %v111
    %200 = vmatpush2.msra.mxu0 %v110
    %201 = vmatprep.subr.mxu0 %v109
    %202 = vmatpush2.msra.mxu0 %v108
    %203 = vmatprep.subr.mxu0 %v107
    %204 = vmatpush2.msra.mxu0 %v106
    %205 = vmatprep.subr.mxu0 %v105
    %206 = vmatpush2.msra.mxu0 %v104
    %207 = vmatprep.subr.mxu0 %v103
    %208 = vmatpush2.msra.mxu0 %v102
    %209 = vmatprep.subr.mxu0 %v101
    %210 = vmatpush2.msra.mxu0 %v100
    %211 = vmatprep.subr.mxu0 %v99
    %212 = vmatpush2.msra.mxu0 %v98
    %213 = vmatprep.subr.mxu0 %v97
    %214 = vmatpush2.msra.mxu0 %v96
    %215 = vmatprep.subr.mxu0 %v95
    %216 = vmatpush2.msra.mxu0 %v94
    %217 = vmatprep.subr.mxu0 %v93
    %218 = vmatpush2.msra.mxu0 %v92
    %219 = vmatprep.subr.mxu0 %v91
    %220 = vmatpush2.msra.mxu0 %v90
    %221 = vmatprep.mubr.f32.mxu0 %v56
    %222 = vmatmul.mubr.f32.gmra.mxu0 %v55
    %v223 = vpop.f32.mrf.mxu0
    %v224 = vadd.f32 %v139, %v223
    %v225 = vpop.f32.mrf.mxu0
    %v226 = vadd.f32 %v143, %v225
    %227 = vdwg.mxu0
    %228 = vmatprep.subr.mxu0 0.0
    %229 = vmatpush1.msra.mxu0 0.0
    %230 = vmatprep.subr.mxu0 0.0
    %231 = vmatpush1.msra.mxu0 0.0
    %232 = vmatprep.subr.mxu0 0.0
    %233 = vmatpush1.msra.mxu0 0.0
    %234 = vmatprep.subr.mxu0 0.0
    %235 = vmatpush1.msra.mxu0 0.0
    %236 = vmatprep.subr.mxu0 0.0
    %237 = vmatpush1.msra.mxu0 0.0
    %238 = vmatprep.subr.mxu0 0.0
    %239 = vmatpush1.msra.mxu0 0.0
    %240 = vmatprep.subr.mxu0 0.0
    %241 = vmatpush1.msra.mxu0 0.0
    %242 = vmatprep.subr.mxu0 0.0
    %243 = vmatpush1.msra.mxu0 0.0
    %244 = vmatprep.subr.mxu0 0.0
    %245 = vmatpush1.msra.mxu0 0.0
    %246 = vmatprep.subr.mxu0 0.0
    %247 = vmatpush1.msra.mxu0 0.0
    %248 = vmatprep.subr.mxu0 %v155
    %249 = vmatpush1.msra.mxu0 %v152
    %250 = vmatprep.subr.mxu0 %v131
    %251 = vmatpush1.msra.mxu0 %v130
    %252 = vmatprep.subr.mxu0 %v129
    %253 = vmatpush1.msra.mxu0 %v128
    %254 = vmatprep.subr.mxu0 %v127
    %255 = vmatpush1.msra.mxu0 %v126
    %256 = vmatprep.subr.mxu0 %v125
    %257 = vmatpush1.msra.mxu0 %v124
    %258 = vmatprep.subr.mxu0 %v123
    %259 = vmatpush1.msra.mxu0 %v122
    %260 = vmatprep.subr.mxu0 0.0
    %261 = vmatpush2.msra.mxu0 0.0
    %262 = vmatprep.subr.mxu0 0.0
    %263 = vmatpush2.msra.mxu0 0.0
    %264 = vmatprep.subr.mxu0 0.0
    %265 = vmatpush2.msra.mxu0 0.0
    %266 = vmatprep.subr.mxu0 0.0
    %267 = vmatpush2.msra.mxu0 0.0
    %268 = vmatprep.subr.mxu0 0.0
    %269 = vmatpush2.msra.mxu0 0.0
    %270 = vmatprep.subr.mxu0 0.0
    %271 = vmatpush2.msra.mxu0 0.0
    %272 = vmatprep.subr.mxu0 0.0
    %273 = vmatpush2.msra.mxu0 0.0
    %274 = vmatprep.subr.mxu0 0.0
    %275 = vmatpush2.msra.mxu0 0.0
    %276 = vmatprep.subr.mxu0 0.0
    %277 = vmatpush2.msra.mxu0 0.0
    %278 = vmatprep.subr.mxu0 0.0
    %279 = vmatpush2.msra.mxu0 0.0
    %280 = vmatprep.subr.mxu0 0.0
    %281 = vmatpush2.msra.mxu0 0.0
    %282 = vmatprep.subr.mxu0 0.0
    %283 = vmatpush2.msra.mxu0 0.0
    %284 = vmatprep.subr.mxu0 0.0
    %285 = vmatpush2.msra.mxu0 0.0
    %286 = vmatprep.subr.mxu0 0.0
    %287 = vmatpush2.msra.mxu0 0.0
    %288 = vmatprep.subr.mxu0 0.0
    %289 = vmatpush2.msra.mxu0 0.0
    %290 = vmatprep.subr.mxu0 0.0
    %291 = vmatpush2.msra.mxu0 0.0
    %292 = vmatprep.mubr.f32.mxu0 0.0
    %293 = vmatmul.mubr.f32.gmra.mxu0 %v148
    %v294 = vpop.f32.mrf.mxu0
    %v295 = vadd.f32 %v224, %v294
    %v296 = vpop.f32.mrf.mxu0
    %v297 = vadd.f32 %v226, %v296
    %298 = vdwg.mxu0
    %vm299 = vcmp.gt.f32.partialorder %v295, 0.0
    %vm300 = vcmp.gt.f32.partialorder %v297, 0.0
    %v301 = vmul.f32 %v295, 0.01
    %v302 = vmul.f32 %v297, 0.01
    %v303 = vsel %vm299, %v295, %v301
    %v304 = vsel %vm300, %v297, %v302
    %v305 = vld [vmem:[#allocation5] sm:$0xff]
    %v306 = vld [vmem:[#allocation5 + $0x8] sm:$0xff]
    %v307 = vld [vmem:[#allocation5 + $0x10] sm:$0xff]
    %v308 = vld [vmem:[#allocation5 + $0x18] sm:$0xff]
    %v309 = vld [vmem:[#allocation5 + $0x20] sm:$0xff]
    %v310 = vld [vmem:[#allocation5 + $0x28] sm:$0xff]
    %v311 = vld [vmem:[#allocation5 + $0x30] sm:$0xff]
    %v312 = vld [vmem:[#allocation5 + $0x38] sm:$0xff]
    %v313 = vld [vmem:[#allocation5 + $0x40] sm:$0xff]
    %v314 = vld [vmem:[#allocation5 + $0x48] sm:$0xff]
    %v315 = vld [vmem:[#allocation5 + $0x50] sm:$0xff]
    %v316 = vld [vmem:[#allocation5 + $0x58] sm:$0xff]
    %v317 = vld [vmem:[#allocation5 + $0x60] sm:$0xff]
    %v318 = vld [vmem:[#allocation5 + $0x68] sm:$0xff]
    %v319 = vld [vmem:[#allocation5 + $0x70] sm:$0xff]
    %v320 = vld [vmem:[#allocation5 + $0x78] sm:$0xff]
    %v321 = vld [vmem:[#allocation5 + $0x80] sm:$0xff]
    %v322 = vld [vmem:[#allocation5 + $0x88] sm:$0xff]
    %v323 = vld [vmem:[#allocation5 + $0x90] sm:$0xff]
    %v324 = vld [vmem:[#allocation5 + $0x98] sm:$0xff]
    %v325 = vld [vmem:[#allocation5 + $0xa0] sm:$0xff]
    %v326 = vld [vmem:[#allocation5 + $0xa8] sm:$0xff]
    %v327 = vld [vmem:[#allocation5 + $0xb0] sm:$0xff]
    %v328 = vld [vmem:[#allocation5 + $0xb8] sm:$0xff]
    %v329 = vld [vmem:[#allocation5 + $0xc0] sm:$0xff]
    %v330 = vld [vmem:[#allocation5 + $0xc8] sm:$0xff]
    %v331 = vld [vmem:[#allocation5 + $0xd0] sm:$0xff]
    %v332 = vld [vmem:[#allocation5 + $0xd8] sm:$0xff]
    %v333 = vld [vmem:[#allocation5 + $0xe0] sm:$0xff]
    %v334 = vld [vmem:[#allocation5 + $0xe8] sm:$0xff]
    %v335 = vld [vmem:[#allocation5 + $0xf0] sm:$0xff]
    %v336 = vld [vmem:[#allocation5 + $0xf8] sm:$0xff]
    %v337 = vld [vmem:[%s4] sm:$0x1]
    %v339 = vlaneseq
    %v340 = vshrl.u32 %v339, 7
    %v341 = vsub.s32 0, %v340
    %v342 = vrot.slane %v337, %v341
    %344 = vmatprep.subr.mxu0 0.0
    %345 = vmatpush1.msra.mxu0 %v320
    %346 = vmatprep.subr.mxu0 0.0
    %347 = vmatpush1.msra.mxu0 %v319
    %348 = vmatprep.subr.mxu0 0.0
    %349 = vmatpush1.msra.mxu0 %v318
    %350 = vmatprep.subr.mxu0 0.0
    %351 = vmatpush1.msra.mxu0 %v317
    %352 = vmatprep.subr.mxu0 0.0
    %353 = vmatpush1.msra.mxu0 %v316
    %354 = vmatprep.subr.mxu0 0.0
    %355 = vmatpush1.msra.mxu0 %v315
    %356 = vmatprep.subr.mxu0 0.0
    %357 = vmatpush1.msra.mxu0 %v314
    %358 = vmatprep.subr.mxu0 0.0
    %359 = vmatpush1.msra.mxu0 %v313
    %360 = vmatprep.subr.mxu0 0.0
    %361 = vmatpush1.msra.mxu0 %v312
    %362 = vmatprep.subr.mxu0 0.0
    %363 = vmatpush1.msra.mxu0 %v311
    %364 = vmatprep.subr.mxu0 0.0
    %365 = vmatpush1.msra.mxu0 %v310
    %366 = vmatprep.subr.mxu0 0.0
    %367 = vmatpush1.msra.mxu0 %v309
    %368 = vmatprep.subr.mxu0 0.0
    %369 = vmatpush1.msra.mxu0 %v308
    %370 = vmatprep.subr.mxu0 0.0
    %371 = vmatpush1.msra.mxu0 %v307
    %372 = vmatprep.subr.mxu0 0.0
    %373 = vmatpush1.msra.mxu0 %v306
    %374 = vmatprep.subr.mxu0 0.0
    %375 = vmatpush1.msra.mxu0 %v305
    %376 = vmatprep.subr.mxu0 0.0
    %377 = vmatpush2.msra.mxu0 %v336
    %378 = vmatprep.subr.mxu0 0.0
    %379 = vmatpush2.msra.mxu0 %v335
    %380 = vmatprep.subr.mxu0 0.0
    %381 = vmatpush2.msra.mxu0 %v334
    %382 = vmatprep.subr.mxu0 0.0
    %383 = vmatpush2.msra.mxu0 %v333
    %384 = vmatprep.subr.mxu0 0.0
    %385 = vmatpush2.msra.mxu0 %v332
    %386 = vmatprep.subr.mxu0 0.0
    %387 = vmatpush2.msra.mxu0 %v331
    %388 = vmatprep.subr.mxu0 0.0
    %389 = vmatpush2.msra.mxu0 %v330
    %390 = vmatprep.subr.mxu0 0.0
    %391 = vmatpush2.msra.mxu0 %v329
    %392 = vmatprep.subr.mxu0 0.0
    %393 = vmatpush2.msra.mxu0 %v328
    %394 = vmatprep.subr.mxu0 0.0
    %395 = vmatpush2.msra.mxu0 %v327
    %396 = vmatprep.subr.mxu0 0.0
    %397 = vmatpush2.msra.mxu0 %v326
    %398 = vmatprep.subr.mxu0 0.0
    %399 = vmatpush2.msra.mxu0 %v325
    %400 = vmatprep.subr.mxu0 0.0
    %401 = vmatpush2.msra.mxu0 %v324
    %402 = vmatprep.subr.mxu0 0.0
    %403 = vmatpush2.msra.mxu0 %v323
    %404 = vmatprep.subr.mxu0 0.0
    %405 = vmatpush2.msra.mxu0 %v322
    %406 = vmatprep.subr.mxu0 0.0
    %407 = vmatpush2.msra.mxu0 %v321
    %408 = vmatprep.mubr.f32.mxu0 %v304
    %409 = vmatmul.mubr.f32.gmra.mxu0 %v303
    %v410 = vpop.f32.mrf.mxu0
    %v411 = vadd.f32 %v342, %v410
    %v412 = vpop.f32.mrf.mxu0
    %413 = vdwg.mxu0
    %vm414 = vcmp.gt.f32.partialorder %v411, 0.0
    %v415 = vmul.f32 %v411, 0.01
    %v416 = vsel %vm414, %v411, %v415
    %v417 = vld [vmem:[%s5] sm:$0xff]
    %v418 = vld [vmem:[%s5 + $0x8] sm:$0xff]
    %v419 = vld [vmem:[%s5 + $0x10] sm:$0xff]
    %v420 = vld [vmem:[%s5 + $0x18] sm:$0xff]
    %v421 = vld [vmem:[%s5 + $0x20] sm:$0xff]
    %v422 = vld [vmem:[%s5 + $0x28] sm:$0xff]
    %v423 = vld [vmem:[%s5 + $0x30] sm:$0xff]
    %v424 = vld [vmem:[%s5 + $0x38] sm:$0xff]
    %v425 = vld [vmem:[%s5 + $0x40] sm:$0xff]
    %v426 = vld [vmem:[%s5 + $0x48] sm:$0xff]
    %v427 = vld [vmem:[%s5 + $0x50] sm:$0xff]
    %v428 = vld [vmem:[%s5 + $0x58] sm:$0xff]
    %v429 = vld [vmem:[%s5 + $0x60] sm:$0xff]
    %v430 = vld [vmem:[%s5 + $0x68] sm:$0xff]
    %v431 = vld [vmem:[%s5 + $0x70] sm:$0xff]
    %v432 = vld [vmem:[%s5 + $0x78] sm:$0xff]
    %v433 = vld [vmem:[%s6] sm:$0x1]
    %v435 = vlaneseq
    %v436 = vshrl.u32 %v435, 7
    %v437 = vsub.s32 0, %v436
    %v438 = vrot.slane %v433, %v437
    %440 = vmatprep.subr.mxu0 0.0
    %441 = vmatpush1.msra.mxu0 %v432
    %442 = vmatprep.subr.mxu0 0.0
    %443 = vmatpush1.msra.mxu0 %v431
    %444 = vmatprep.subr.mxu0 0.0
    %445 = vmatpush1.msra.mxu0 %v430
    %446 = vmatprep.subr.mxu0 0.0
    %447 = vmatpush1.msra.mxu0 %v429
    %448 = vmatprep.subr.mxu0 0.0
    %449 = vmatpush1.msra.mxu0 %v428
    %450 = vmatprep.subr.mxu0 0.0
    %451 = vmatpush1.msra.mxu0 %v427
    %452 = vmatprep.subr.mxu0 0.0
    %453 = vmatpush1.msra.mxu0 %v426
    %454 = vmatprep.subr.mxu0 0.0
    %455 = vmatpush1.msra.mxu0 %v425
    %456 = vmatprep.subr.mxu0 0.0
    %457 = vmatpush1.msra.mxu0 %v424
    %458 = vmatprep.subr.mxu0 0.0
    %459 = vmatpush1.msra.mxu0 %v423
    %460 = vmatprep.subr.mxu0 0.0
    %461 = vmatpush1.msra.mxu0 %v422
    %462 = vmatprep.subr.mxu0 0.0
    %463 = vmatpush1.msra.mxu0 %v421
    %464 = vmatprep.subr.mxu0 0.0
    %465 = vmatpush1.msra.mxu0 %v420
    %466 = vmatprep.subr.mxu0 0.0
    %467 = vmatpush1.msra.mxu0 %v419
    %468 = vmatprep.subr.mxu0 0.0
    %469 = vmatpush1.msra.mxu0 %v418
    %470 = vmatprep.subr.mxu0 0.0
    %471 = vmatpush1.msra.mxu0 %v417
    %472 = vmatprep.subr.mxu0 0.0
    %473 = vmatpush2.msra.mxu0 0.0
    %474 = vmatprep.subr.mxu0 0.0
    %475 = vmatpush2.msra.mxu0 0.0
    %476 = vmatprep.subr.mxu0 0.0
    %477 = vmatpush2.msra.mxu0 0.0
    %478 = vmatprep.subr.mxu0 0.0
    %479 = vmatpush2.msra.mxu0 0.0
    %480 = vmatprep.subr.mxu0 0.0
    %481 = vmatpush2.msra.mxu0 0.0
    %482 = vmatprep.subr.mxu0 0.0
    %483 = vmatpush2.msra.mxu0 0.0
    %484 = vmatprep.subr.mxu0 0.0
    %485 = vmatpush2.msra.mxu0 0.0
    %486 = vmatprep.subr.mxu0 0.0
    %487 = vmatpush2.msra.mxu0 0.0
    %488 = vmatprep.subr.mxu0 0.0
    %489 = vmatpush2.msra.mxu0 0.0
    %490 = vmatprep.subr.mxu0 0.0
    %491 = vmatpush2.msra.mxu0 0.0
    %492 = vmatprep.subr.mxu0 0.0
    %493 = vmatpush2.msra.mxu0 0.0
    %494 = vmatprep.subr.mxu0 0.0
    %495 = vmatpush2.msra.mxu0 0.0
    %496 = vmatprep.subr.mxu0 0.0
    %497 = vmatpush2.msra.mxu0 0.0
    %498 = vmatprep.subr.mxu0 0.0
    %499 = vmatpush2.msra.mxu0 0.0
    %500 = vmatprep.subr.mxu0 0.0
    %501 = vmatpush2.msra.mxu0 0.0
    %502 = vmatprep.subr.mxu0 0.0
    %503 = vmatpush2.msra.mxu0 0.0
    %504 = vmatprep.mubr.f32.mxu0 0.0
    %505 = vmatmul.mubr.f32.gmra.mxu0 %v416
    %v506 = vpop.f32.mrf.mxu0
    %v507 = vadd.f32 %v438, %v506
    %v508 = vpop.f32.mrf.mxu0
    %509 = vdwg.mxu0
    %vm510 = vcmp.gt.f32.partialorder %v507, 0.0
    %v511 = vmul.f32 %v507, 0.01
    %v512 = vsel %vm510, %v507, %v511
    %vm513 = vcmask 261120
    %514 = vst.msk [vmem:[#allocation7] sm:$0xff] %vm513, %v512
    // Predicated region
    $region38: #{tpu_custom_call.1} parent=1 // pred_check
      _
    $region39: #{tpu_custom_call.1} parent=1 // pred_check_branch
      %516 = sbr.rel (0) target = $region41
    $region40: #{tpu_custom_call.1} parent=1 // pred_region
      %s518 = ssub.s32 128, 128
      %519 = vsyncadd [#allocation4], %s518
      %s521 = sshll.u32 [#allocation7], 4
      %s522 = int_to_ptr.vmem [resolvable:$true] %s521
      %524 = dma.vmem_to_hbm [thread:$0]  %s522, 128, %s7, [#allocation4]
    $region41: #{tpu_custom_call.1} parent=1 // pred_fallthru
      _
    // Predicated region
    $region42: #{tpu_custom_call.1} parent=1 // pred_check
      _
    $region43: #{tpu_custom_call.1} parent=1 // pred_check_branch
      %526 = sbr.rel (0) target = $region45
    $region44: #{tpu_custom_call.1} parent=1 // pred_region
      %527 = dma.done [#allocation4], 128
    $region45: #{tpu_custom_call.1} parent=1 // pred_fallthru
      _
    %528 = vsyncpa [#allocation3], 1
    %529 = vsyncpa [#allocation6], 1
    %530 = vsyncpa [#allocation4], 1

</llo_original>
